<compile_context>
chip_gen: v6e
topology: v6e:2x2x1
jax: 0.10.0
libtpu: 0.0.40
codegen_flags: <defaults>
</compile_context>

<pallas_src>
import functools

import jax
import jax.numpy as jnp
from jax import lax
from jax.experimental import pallas as pl
from jax.experimental.pallas import tpu as pltpu

LRELU_SLOPE = 0.1


def _round_up(x, m):
    return ((x + m - 1) // m) * m


# ---------------------------------------------------------------------------
# Pallas kernel: out = leaky_relu(x @ w + b) (activation optional).
# Grid = (M_blocks, N_blocks, K_blocks); K (reduction) is last/"arbitrary".
# f32 accumulation in a VMEM scratch (initialized with the broadcast bias at
# k==0), bf16/f32 output written on the final K step.
# ---------------------------------------------------------------------------
def _mm_bias_act_kernel(x_ref, w_ref, b_ref, o_ref, acc_ref, *, apply_act, slope):
    k = pl.program_id(2)

    @pl.when(k == 0)
    def _():
        # Init with the broadcast bias -> saves the epilogue add (review item).
        acc_ref[...] = jnp.broadcast_to(b_ref[...], acc_ref.shape)

    acc_ref[...] += jnp.dot(
        x_ref[...], w_ref[...], preferred_element_type=jnp.float32
    )

    @pl.when(k == pl.num_programs(2) - 1)
    def _():
        y = acc_ref[...]
        if apply_act:
            y = jnp.maximum(y, slope * y)  # leaky-relu for slope in (0, 1)
        o_ref[...] = y.astype(o_ref.dtype)


def _pick_tk(K):
    """Reduction tile. Must divide K exactly (a garbage K-tail would corrupt
    the accumulator): full-extent block for small K, aligned divisor for large
    K, zero-pad only as a last resort (never hit for this model)."""
    if K <= 1024:
        return K, K
    for cand in (512, 256, 128):
        if K % cand == 0:
            return cand, K
    return 256, _round_up(K, 256)  # fallback: caller zero-pads K


def _pick_tn(N):
    """Output-channel tile: full N whenever it fits a block (<=1024) so the
    im2col matrix is read from HBM exactly once; divisor tiles otherwise."""
    if N <= 1024:
        return N, N
    for cand in (512, 256, 128):
        if N % cand == 0:
            return cand, N
    return 128, _round_up(N, 128)  # fallback: caller zero-pads N


def matmul_bias_act(x, w, b, *, apply_act, slope=LRELU_SLOPE,
                    out_dtype=jnp.bfloat16, tm_max=1024):
    """x: (M, K), w: (K, N), b: (N,) -> (M, N) of (x @ w + b) [+ leaky-relu].

    bf16 MXU inputs, f32 VMEM accumulation, `out_dtype` output (bf16 for the
    hidden activations that feed the next layer, f32 where requested).
    """
    M, K = x.shape
    K2, N = w.shape
    assert K == K2 and b.shape == (N,)

    x = x.astype(jnp.bfloat16)
    w = w.astype(jnp.bfloat16)
    b = b.astype(jnp.float32)

    tk, Kp = _pick_tk(K)
    tn, Np = _pick_tn(N)
    if Kp != K:  # never hit for this model
        x = jnp.pad(x, ((0, 0), (0, Kp - K)))
        w = jnp.pad(w, ((0, Kp - K), (0, 0)))
    if Np != N:  # never hit for this model
        w = jnp.pad(w, ((0, 0), (0, Np - N)))
        b = jnp.pad(b, ((0, Np - N),))

    # M tail handled by a partial (cdiv) block; rows are independent in a
    # matmul so padded rows never contaminate valid output rows.
    tm = min(tm_max, _round_up(M, 16))
    # With tn == N there is a single N block; keep >= 2 M blocks when M is big
    # enough so both TensorCores of a v7x chip get parallel work.
    if M > 256 and pl.cdiv(M, tm) < 2:
        tm = _round_up(pl.cdiv(M, 2), 16)

    b2 = b.reshape(1, Np)
    grid = (pl.cdiv(M, tm), Np // tn, Kp // tk)

    out = pl.pallas_call(
        functools.partial(_mm_bias_act_kernel, apply_act=apply_act, slope=slope),
        out_shape=jax.ShapeDtypeStruct((M, Np), out_dtype),
        grid_spec=pltpu.PrefetchScalarGridSpec(
            num_scalar_prefetch=0,
            grid=grid,
            in_specs=[
                pl.BlockSpec((tm, tk), lambda m, n, k: (m, k)),
                pl.BlockSpec((tk, tn), lambda m, n, k: (k, n)),
                pl.BlockSpec((1, tn), lambda m, n, k: (0, n)),
            ],
            out_specs=pl.BlockSpec((tm, tn), lambda m, n, k: (m, n)),
            scratch_shapes=[pltpu.VMEM((tm, tn), jnp.float32)],
        ),
        compiler_params=pltpu.CompilerParams(
            dimension_semantics=("parallel", "parallel", "arbitrary"),
            vmem_limit_bytes=32 * 1024 * 1024,
        ),
    )(x, w, b2)

    return out if Np == N else out[:, :N]


# ---------------------------------------------------------------------------
# Conv2d with kernel (K, 1), stride (S, 1), padding (P, 0) on channels-last
# (NHWC) input: channels-last im2col (JAX glue) feeding the Pallas matmul.
# ---------------------------------------------------------------------------
def conv2d_kx1_nhwc(x_nhwc, weight, bias, *, stride, padding, apply_act,
                    out_dtype=jnp.bfloat16):
    B, H, W, Cin = x_nhwc.shape
    Cout, Cin2, K, Kw = weight.shape
    assert Cin == Cin2 and Kw == 1

    # Cast before im2col so the tap-duplicated matrix is materialized in bf16.
    x_bf = x_nhwc.astype(jnp.bfloat16)
    x_pad = jnp.pad(x_bf, ((0, 0), (padding, padding), (0, 0), (0, 0)))
    Hp = H + 2 * padding
    H_out = (Hp - K) // stride + 1

    # Channels-last im2col: (B, H_out, W, K, Cin) -> (M, K*Cin); tap-major /
    # cin-minor column order, C stays on the lane axis.
    # TODO(synk): fold the K taps into the kernel's reduction grid (per-tap DMA
    # offsets into the padded activation) so this tap-duplicated matrix is
    # never materialized in HBM; it is the remaining big HBM term for the
    # stride-1 1024->1024 layer (5x duplication).
    taps = [
        x_pad[:, k : k + stride * (H_out - 1) + 1 : stride, :, :] for k in range(K)
    ]
    x_col = jnp.stack(taps, axis=3).reshape(B * H_out * W, K * Cin)

    # PyTorch OIHW (Cout, Cin, K, 1) -> (K, Cin, Cout) -> (K*Cin, Cout).
    w_mat = jnp.transpose(weight[..., 0], (2, 1, 0)).reshape(K * Cin, Cout)

    y = matmul_bias_act(x_col, w_mat, bias, apply_act=apply_act,
                        out_dtype=out_dtype)
    return y.reshape(B, H_out, W, Cout)  # stay NHWC for the next layer


def conv0_taps_jax(x_nhwc, weight, bias, *, stride, padding):
    """First conv (Cin == 1): K-tap weighted sum in plain JAX. K*Cin == 5 and
    Cout == 32 are far below the 128-lane width, so the Pallas matmul path
    would be all masked vld/vst with ~0 MXU utilization (review item)."""
    B, H, W, Cin = x_nhwc.shape
    assert Cin == 1
    Cout, _, K, _ = weight.shape
    x_pad = jnp.pad(x_nhwc[..., 0].astype(jnp.float32),
                    ((0, 0), (padding, padding), (0, 0)))
    H_out = (H + 2 * padding - K) // stride + 1
    y = bias.reshape(1, 1, 1, Cout).astype(jnp.float32)
    for k in range(K):
        tap = x_pad[:, k : k + stride * (H_out - 1) + 1 : stride, :]  # (B,Ho,W)
        y = y + tap[..., None] * weight[:, 0, k, 0].reshape(1, 1, 1, Cout)
    return jnp.maximum(y, LRELU_SLOPE * y)  # (B, H_out, W, Cout) f32


def conv_post_1ch(x_nhwc, weight, bias, *, padding):
    """conv_post (Cout == 1, stride 1): project Cin -> K with the Pallas matmul
    (activation read once, no K-fold im2col), then a K-tap shift-add in JAX.
    Avoids an N=1 MXU matmul and a 1-lane-wide kernel output (review item)."""
    B, H, W, Cin = x_nhwc.shape
    Cout, Cin2, K, Kw = weight.shape
    assert Cout == 1 and Cin == Cin2 and Kw == 1
    w_mat = weight[0, :, :, 0]  # (Cin, K)
    z = matmul_bias_act(
        x_nhwc.reshape(B * H * W, Cin), w_mat, jnp.zeros((K,), jnp.float32),
        apply_act=False, out_dtype=jnp.float32)
    z = z.reshape(B, H, W, K)
    z = jnp.pad(z, ((0, 0), (padding, padding), (0, 0), (0, 0)))
    H_out = H + 2 * padding - K + 1
    y = bias[0]
    for k in range(K):
        y = y + z[:, k : k + H_out, :, k]
    return y[..., None]  # (B, H_out, W, 1) NHWC, f32


# ---------------------------------------------------------------------------
# DiscriminatorP forward
# ---------------------------------------------------------------------------
def get_padding(kernel_size, dilation=1):
    return int((kernel_size * dilation - dilation) / 2)


def init_discriminator_p_params(key, kernel_size=5):
    layer_specs = [  # (cin, cout, k, stride, pad)
        (1, 32, kernel_size, 3, get_padding(5, 1)),
        (32, 128, kernel_size, 3, get_padding(5, 1)),
        (128, 512, kernel_size, 3, get_padding(5, 1)),
        (512, 1024, kernel_size, 3, get_padding(5, 1)),
        (1024, 1024, kernel_size, 1, 2),
    ]
    params = {"convs": []}
    for cin, cout, k, stride, pad in layer_specs:
        key, wk, bk = jax.random.split(key, 3)
        scale = 1.0 / jnp.sqrt(cin * k)
        w = jax.random.normal(wk, (cout, cin, k, 1), jnp.float32) * scale
        b = jax.random.normal(bk, (cout,), jnp.float32) * 0.01
        params["convs"].append((w, b, stride, pad))
    key, wk, bk = jax.random.split(key, 3)
    w = jax.random.normal(wk, (1, 1024, 3, 1), jnp.float32) * (1.0 / jnp.sqrt(1024 * 3))
    b = jax.random.normal(bk, (1,), jnp.float32) * 0.01
    params["conv_post"] = (w, b)
    return params


def discriminator_p_forward(x, params, period):
    b, c, t = x.shape
    if t % period != 0:
        n_pad = period - t % period
        x = jnp.pad(x, ((0, 0), (0, 0), (0, n_pad)), mode="reflect")
        t = t + n_pad
    x = x.reshape(b, c, t // period, period)      # NCHW (C == 1)
    x = jnp.transpose(x, (0, 2, 3, 1))            # NHWC between layers

    fmap = []
    convs = params["convs"]

    # Layer 0 (Cin=1): plain-JAX 5-tap sum (too narrow for MXU / 128 lanes).
    w0, b0, s0, p0 = convs[0]
    x = conv0_taps_jax(x, w0, b0, stride=s0, padding=p0)          # f32 NHWC
    fmap.append(jnp.transpose(x, (0, 3, 1, 2)))                   # fmap is NCHW

    # Layers 1..4: Pallas fused conv, bf16 activations between layers.
    for w, bias, stride, pad in convs[1:]:
        x = conv2d_kx1_nhwc(x, w, bias, stride=stride, padding=pad,
                            apply_act=True, out_dtype=jnp.bfloat16)
        # Transpose the bf16 tensor (half the re-layout traffic), cast after to
        # keep the f32 fmap contract.
        fmap.append(jnp.transpose(x, (0, 3, 1, 2)).astype(jnp.float32))

    # conv_post: Pallas Cin->3 projection + 3-tap shift-add, f32 output.
    w, bias = params["conv_post"]
    x = conv_post_1ch(x, w, bias, padding=1)                      # (B,H,W,1) f32
    x_nchw = jnp.transpose(x, (0, 3, 1, 2))
    fmap.append(x_nchw)
    out = x_nchw.reshape(b, -1)
    return out, fmap


# ---------------------------------------------------------------------------
# Pure-JAX reference (lax.conv, same bf16-inputs / f32-accumulation recipe).
# ---------------------------------------------------------------------------
def discriminator_p_ref(x, params, period):
    b, c, t = x.shape
    if t % period != 0:
        n_pad = period - t % period
        x = jnp.pad(x, ((0, 0), (0, 0), (0, n_pad)), mode="reflect")
        t = t + n_pad
    x = x.reshape(b, c, t // period, period)

    def conv(x, w, bias, stride, pad):
        y = lax.conv_general_dilated(
            x.astype(jnp.bfloat16), w.astype(jnp.bfloat16),
            window_strides=(stride, 1), padding=((pad, pad), (0, 0)),
            dimension_numbers=("NCHW", "OIHW", "NCHW"),
            preferred_element_type=jnp.float32)
        return y + bias.reshape(1, -1, 1, 1)

    fmap = []
    for w, bias, stride, pad in params["convs"]:
        x = conv(x, w, bias, stride, pad)
        x = jnp.where(x > 0, x, LRELU_SLOPE * x)
        fmap.append(x)
    w, bias = params["conv_post"]
    x = conv(x, w, bias, 1, 1)
    fmap.append(x)
    x = x.reshape(b, -1)
    return x, fmap


if __name__ == "__main__":
    import numpy as np

    key = jax.random.PRNGKey(0)
    key, pkey, xkey = jax.random.split(key, 3)

    period = 3
    B, C, T = 2, 1, 22  # T % period != 0 -> exercises the reflect-pad branch
    x = jax.random.normal(xkey, (B, C, T), jnp.float32)

    params = init_discriminator_p_params(pkey)

    out, fmap = discriminator_p_forward(x, params, period)
    out = jax.block_until_ready(out)
    fmap = [jax.block_until_ready(f) for f in fmap]

    out_ref, fmap_ref = discriminator_p_ref(x, params, period)

    # bf16 MXU inputs + bf16 inter-layer activations on the Pallas path vs bf16
    # conv inputs / f32 activations on the reference path -> differences are
    # bf16 rounding + f32 summation order only.
    np.testing.assert_allclose(np.asarray(out), np.asarray(out_ref),
                               rtol=2.5e-2, atol=2.5e-2)
    for f, fr in zip(fmap, fmap_ref):
        assert f.shape == fr.shape
        np.testing.assert_allclose(np.asarray(f), np.asarray(fr),
                                   rtol=2.5e-2, atol=2.5e-2)

    print("KERNEL_OK")
</pallas_src>

<mosaic_0001>
module attributes {stable_mosaic.version = 11 : i64} {
  func.func @_mm_bias_act_kernel(%arg0: i32, %arg1: i32, %arg2: i32, %arg3: memref<16x160xbf16, #tpu.memory_space<vmem>>, %arg4: memref<160x128xbf16, #tpu.memory_space<vmem>>, %arg5: memref<1x128xf32, #tpu.memory_space<vmem>>, %arg6: memref<16x128xbf16, #tpu.memory_space<vmem>>, %arg7: memref<16x128xf32, #tpu.memory_space<vmem>>) attributes {dimension_semantics = [#tpu.dimension_semantics<parallel>, #tpu.dimension_semantics<parallel>, #tpu.dimension_semantics<arbitrary>], iteration_bounds = array<i64: 1, 1, 1>, scalar_prefetch = 0 : i64, scratch_operands = 1 : i64, tpu.core_type = #tpu.core_type<tc>, window_params = [{transform_indices = @transform_0, window_bounds = array<i64: 16, 160>}, {transform_indices = @transform_1, window_bounds = array<i64: 160, 128>}, {transform_indices = @transform_2, window_bounds = array<i64: 1, 128>}, {transform_indices = @transform_3, window_bounds = array<i64: 16, 128>}]} {
    %c0_i32 = arith.constant 0 : i32
    %0 = arith.cmpi eq, %arg2, %c0_i32 : i32
    %1 = arith.extui %0 : i1 to i32
    %c0_i32_0 = arith.constant 0 : i32
    %2 = arith.cmpi ne, %1, %c0_i32_0 : i32
    scf.if %2 {
      %c0_10 = arith.constant 0 : index
      %c0_11 = arith.constant 0 : index
      %12 = vector.load %arg5[%c0_10, %c0_11] : memref<1x128xf32, #tpu.memory_space<vmem>>, vector<1x128xf32>
      %13 = vector.shape_cast %12 : vector<1x128xf32> to vector<1x128xf32>
      %14 = vector.broadcast %13 : vector<1x128xf32> to vector<16x128xf32>
      %c0_12 = arith.constant 0 : index
      %c0_13 = arith.constant 0 : index
      %15 = vector.load %arg7[%c0_12, %c0_13] : memref<16x128xf32, #tpu.memory_space<vmem>>, vector<16x128xf32>
      tpu.vector_store %arg7[%c0_12, %c0_13], %14 {strides = array<i32>} : memref<16x128xf32, #tpu.memory_space<vmem>>, vector<16x128xf32>,
    } else {
    }
    %c0 = arith.constant 0 : index
    %c0_1 = arith.constant 0 : index
    %3 = vector.load %arg7[%c0, %c0_1] : memref<16x128xf32, #tpu.memory_space<vmem>>, vector<16x128xf32>
    %c0_2 = arith.constant 0 : index
    %c0_3 = arith.constant 0 : index
    %4 = vector.load %arg3[%c0_2, %c0_3] : memref<16x160xbf16, #tpu.memory_space<vmem>>, vector<16x160xbf16>
    %c0_4 = arith.constant 0 : index
    %c0_5 = arith.constant 0 : index
    %5 = vector.load %arg4[%c0_4, %c0_5] : memref<160x128xbf16, #tpu.memory_space<vmem>>, vector<160x128xbf16>
    %cst = arith.constant dense<0.000000e+00> : vector<16x128xf32>
    %6 = tpu.matmul %4, %5, %cst {dimension_numbers = #tpu.dot_dimension_numbers<[1], [0], [0], [1], [0, 0, 1, 1], [], []>} : vector<16x160xbf16>, vector<160x128xbf16>, vector<16x128xf32> -> vector<16x128xf32>
    %7 = arith.addf %3, %6 : vector<16x128xf32>
    %c0_6 = arith.constant 0 : index
    %c0_7 = arith.constant 0 : index
    %8 = vector.load %arg7[%c0_6, %c0_7] : memref<16x128xf32, #tpu.memory_space<vmem>>, vector<16x128xf32>
    tpu.vector_store %arg7[%c0_6, %c0_7], %7 {strides = array<i32>} : memref<16x128xf32, #tpu.memory_space<vmem>>, vector<16x128xf32>,
    %c0_i32_8 = arith.constant 0 : i32
    %9 = arith.cmpi eq, %arg2, %c0_i32_8 : i32
    %10 = arith.extui %9 : i1 to i32
    %c0_i32_9 = arith.constant 0 : i32
    %11 = arith.cmpi ne, %10, %c0_i32_9 : i32
    scf.if %11 {
      %c0_10 = arith.constant 0 : index
      %c0_11 = arith.constant 0 : index
      %12 = vector.load %arg7[%c0_10, %c0_11] : memref<16x128xf32, #tpu.memory_space<vmem>>, vector<16x128xf32>
      %cst_12 = arith.constant 1.000000e-01 : f32
      %13 = vector.broadcast %cst_12 : f32 to vector<16x128xf32>
      %14 = arith.mulf %13, %12 : vector<16x128xf32>
      %15 = arith.maximumf %12, %14 : vector<16x128xf32>
      %16 = arith.truncf %15 : vector<16x128xf32> to vector<16x128xbf16>
      %c0_13 = arith.constant 0 : index
      %c0_14 = arith.constant 0 : index
      %17 = vector.load %arg6[%c0_13, %c0_14] : memref<16x128xbf16, #tpu.memory_space<vmem>>, vector<16x128xbf16>
      tpu.vector_store %arg6[%c0_13, %c0_14], %16 {strides = array<i32>} : memref<16x128xbf16, #tpu.memory_space<vmem>>, vector<16x128xbf16>,
    } else {
    }
    return
  }
  func.func @transform_0(%arg0: i32, %arg1: i32, %arg2: i32) -> (i32, i32) {
    %c0_i32 = arith.constant 0 : i32
    return %arg0, %arg2 : i32, i32
  }
  func.func @transform_1(%arg0: i32, %arg1: i32, %arg2: i32) -> (i32, i32) {
    %c0_i32 = arith.constant 0 : i32
    return %arg2, %arg1 : i32, i32
  }
  func.func @transform_2(%arg0: i32, %arg1: i32, %arg2: i32) -> (i32, i32) {
    %c0_i32 = arith.constant 0 : i32
    %c0_i32_0 = arith.constant 0 : i32
    return %c0_i32, %arg1 : i32, i32
  }
  func.func @transform_3(%arg0: i32, %arg1: i32, %arg2: i32) -> (i32, i32) {
    %c0_i32 = arith.constant 0 : i32
    return %arg0, %arg1 : i32, i32
  }
}

</mosaic_0001>

<llo_original>
// kernel: tpu_custom_call.1
$region0: #{tpu_custom_call.1}
  #allocation0 [shape = 'u32[]', space=smem, size = 0x4, offset = 0x4, fixed_abs, tag = 'smem constant byte address 0x4 - core index']
  #allocation1 [shape = 'u32[144,128]{1,0:T(1,128)}', space=vmem, size = 0x12000, scoped, tag = 'internal scratch']
  #allocation2 [shape = 'f32[16,128]{1,0:T(8,128)}', space=vmem, size = 0x2000, scoped, tag = 'scratch operand']
  %s0 = inlined_call_operand.hbm [shape: bf16[6,160], index: 0, kind: input, shape index: {}]
  %s1 = inlined_call_operand.hbm [shape: bf16[160,128], index: 1, kind: input, shape index: {}]
  %s2 = inlined_call_operand.vmem [shape: f32[1,128], index: 2, kind: input, shape index: {}]
  %s3 = inlined_call_operand.hbm [shape: bf16[6,128], index: 3, kind: output, shape index: {}]
  %s4 = sld [smem:[#allocation0]]
  $region38: #{tpu_custom_call.1} parent=0
    _
  %s6 = ssub.s32 1, %s4
  %s7 = scalar_select 0, %s6, %s4
  $region1: #{tpu_custom_call.1} parent=0
    #allocation3 [shape = 'u8[8192]{0}', space=vmem, size = 0x2000, scoped, tag = 'input window, operand 0, single buffered']
    #allocation4 [shape = 's32[1]{0}', space=sflag, size = 0x4, scoped, tag = 'scoped memory for tpu_custom_call.1']
    #allocation5 [shape = 's32[1]{0}', space=sflag, size = 0x4, scoped, tag = 'scoped memory for tpu_custom_call.1']
    #allocation6 [shape = 'u8[40960]{0}', space=vmem, size = 0xa000, scoped, tag = 'input window, operand 1, single buffered']
    #allocation7 [shape = 's32[1]{0}', space=sflag, size = 0x4, scoped, tag = 'scoped memory for tpu_custom_call.1']
    #allocation8 [shape = 'u8[4096]{0}', space=vmem, size = 0x1000, scoped, tag = 'output window, operand 0, single buffered']
    %8 = vsyncpa [#allocation4], 0
    %9 = vsyncpa [#allocation7], 0
    %10 = vsyncpa [#allocation5], 0
    // Predicated region
    $region2: #{tpu_custom_call.1} parent=1 // pred_check
      _
    $region3: #{tpu_custom_call.1} parent=1 // pred_check_branch
      %12 = sbr.rel (0) target = $region5
    $region4: #{tpu_custom_call.1} parent=1 // pred_region
      %s14 = ssub.s32 256, 128
      %15 = vsyncadd [#allocation4], %s14
      %s16 = sshll.u32 [#allocation3], 4
      %s17 = int_to_ptr.vmem [resolvable:$true] %s16
      %22 = dma.hbm_to_vmem [thread:$0]  %s0, 128, %s17, [#allocation4], 128, 128, 8
    $region5: #{tpu_custom_call.1} parent=1 // pred_fallthru
      _
    // Predicated region
    $region6: #{tpu_custom_call.1} parent=1 // pred_check
      _
    $region7: #{tpu_custom_call.1} parent=1 // pred_check_branch
      %24 = sbr.rel (0) target = $region9
    $region8: #{tpu_custom_call.1} parent=1 // pred_region
      %s26 = ssub.s32 1280, 1280
      %27 = vsyncadd [#allocation7], %s26
      %s28 = sshll.u32 [#allocation6], 4
      %s29 = int_to_ptr.vmem [resolvable:$true] %s28
      %34 = dma.hbm_to_vmem [thread:$0]  %s1, 1280, %s29, [#allocation7], 64, 64, 4
    $region9: #{tpu_custom_call.1} parent=1 // pred_fallthru
      _
    // Predicated region
    $region10: #{tpu_custom_call.1} parent=1 // pred_check
      _
    $region11: #{tpu_custom_call.1} parent=1 // pred_check_branch
      %36 = sbr.rel (0) target = $region13
    $region12: #{tpu_custom_call.1} parent=1 // pred_region
      _
    $region13: #{tpu_custom_call.1} parent=1 // pred_fallthru
      _
    // Predicated region
    $region14: #{tpu_custom_call.1} parent=1 // pred_check
      _
    $region15: #{tpu_custom_call.1} parent=1 // pred_check_branch
      %38 = sbr.rel (0) target = $region17
    $region16: #{tpu_custom_call.1} parent=1 // pred_region
      %39 = dma.done [#allocation4], 256
    $region17: #{tpu_custom_call.1} parent=1 // pred_fallthru
      _
    // Predicated region
    $region18: #{tpu_custom_call.1} parent=1 // pred_check
      _
    $region19: #{tpu_custom_call.1} parent=1 // pred_check_branch
      %41 = sbr.rel (0) target = $region21
    $region20: #{tpu_custom_call.1} parent=1 // pred_region
      %42 = dma.done [#allocation7], 1280
    $region21: #{tpu_custom_call.1} parent=1 // pred_fallthru
      _
    %p44 = scmp.eq.s32.totalorder 0, 0
    // Predicated region
    $region22: #{tpu_custom_call.1} parent=1 // pred_check
      %p45 = pneg %p44
    $region23: #{tpu_custom_call.1} parent=1 // pred_check_branch
      %47 = sbr.rel (%p45) target = $region25
    $region24: #{tpu_custom_call.1} parent=1 // pred_region
      %v48 = vld [vmem:[%s2] sm:$0x1]
      %v50 = vlaneseq
      %v51 = vshrl.u32 %v50, 7
      %v52 = vsub.s32 0, %v51
      %v53 = vrot.slane %v48, %v52
      %55 = vst [vmem:[#allocation2] sm:$0xff] %v53
      %56 = vst [vmem:[#allocation2 + $0x8] sm:$0xff] %v53
    $region25: #{tpu_custom_call.1} parent=1 // pred_fallthru
      _
    %v57 = vld [vmem:[#allocation2] sm:$0xff]
    %v58 = vld [vmem:[#allocation2 + $0x8] sm:$0xff]
    %v59 = vld [vmem:[#allocation3] sm:$0xff]
    %v60 = vld [vmem:[#allocation3 + $0x8] sm:$0xff]
    %v61 = vld [vmem:[#allocation6] sm:$0xf]
    %v62 = vld [vmem:[#allocation6 + $0x4] sm:$0xf]
    %v63 = vld [vmem:[#allocation6 + $0x8] sm:$0xf]
    %v64 = vld [vmem:[#allocation6 + $0xc] sm:$0xf]
    %v65 = vld [vmem:[#allocation6 + $0x10] sm:$0xf]
    %v66 = vld [vmem:[#allocation6 + $0x14] sm:$0xf]
    %v67 = vld [vmem:[#allocation6 + $0x18] sm:$0xf]
    %v68 = vld [vmem:[#allocation6 + $0x1c] sm:$0xf]
    %v69 = vld [vmem:[#allocation6 + $0x20] sm:$0xf]
    %v70 = vld [vmem:[#allocation6 + $0x24] sm:$0xf]
    %v71 = vld [vmem:[#allocation6 + $0x28] sm:$0xf]
    %v72 = vld [vmem:[#allocation6 + $0x2c] sm:$0xf]
    %v73 = vld [vmem:[#allocation6 + $0x30] sm:$0xf]
    %v74 = vld [vmem:[#allocation6 + $0x34] sm:$0xf]
    %v75 = vld [vmem:[#allocation6 + $0x38] sm:$0xf]
    %v76 = vld [vmem:[#allocation6 + $0x3c] sm:$0xf]
    %v77 = vld [vmem:[#allocation6 + $0x40] sm:$0xf]
    %v78 = vld [vmem:[#allocation6 + $0x44] sm:$0xf]
    %v79 = vld [vmem:[#allocation6 + $0x48] sm:$0xf]
    %v80 = vld [vmem:[#allocation6 + $0x4c] sm:$0xf]
    %v83 = vunpack.c.l.b16 %v59
    %v84 = vunpack.c.h.b16 %v59
    %v85 = vunpack.c.l.b16 %v60
    %v86 = vunpack.c.h.b16 %v60
    %v87 = vpack.c.b16 %v85, %v83
    %v88 = vpack.c.b16 %v86, %v84
    %v110 = vunpack.c.l.b16 %v61
    %v111 = vunpack.c.l.b16 %v62
    %v112 = vunpack.c.l.b16 %v63
    %v113 = vunpack.c.l.b16 %v64
    %v114 = vunpack.c.l.b16 %v65
    %v115 = vunpack.c.l.b16 %v66
    %v116 = vunpack.c.l.b16 %v67
    %v117 = vunpack.c.l.b16 %v68
    %v118 = vunpack.c.l.b16 %v69
    %v119 = vunpack.c.l.b16 %v70
    %v120 = vunpack.c.l.b16 %v71
    %v121 = vunpack.c.l.b16 %v72
    %v122 = vunpack.c.l.b16 %v73
    %v123 = vunpack.c.l.b16 %v74
    %v124 = vunpack.c.l.b16 %v75
    %v125 = vunpack.c.l.b16 %v76
    %v126 = vunpack.c.l.b16 %v77
    %v127 = vunpack.c.l.b16 %v78
    %v128 = vunpack.c.l.b16 %v79
    %v129 = vunpack.c.l.b16 %v80
    %v130 = vpack.c.b16 %v111, %v110
    %v131 = vpack.c.b16 %v113, %v112
    %v132 = vpack.c.b16 %v115, %v114
    %v133 = vpack.c.b16 %v117, %v116
    %v134 = vpack.c.b16 %v119, %v118
    %v135 = vpack.c.b16 %v121, %v120
    %v136 = vpack.c.b16 %v123, %v122
    %v137 = vpack.c.b16 %v125, %v124
    %v138 = vpack.c.b16 %v127, %v126
    %v139 = vpack.c.b16 %v129, %v128
    %vm150 = vcmask 261120
    %v152 = vsel %vm150, %v88, 0
    %154 = vmatprep.subr.bf16.mxu0 0
    %155 = vmatpush1.bf16.msra.mxu0 %v137
    %156 = vmatprep.subr.bf16.mxu0 0
    %157 = vmatpush1.bf16.msra.mxu0 %v136
    %158 = vmatprep.subr.bf16.mxu0 0
    %159 = vmatpush1.bf16.msra.mxu0 %v135
    %160 = vmatprep.subr.bf16.mxu0 0
    %161 = vmatpush1.bf16.msra.mxu0 %v134
    %162 = vmatprep.subr.bf16.mxu0 0
    %163 = vmatpush1.bf16.msra.mxu0 %v133
    %164 = vmatprep.subr.bf16.mxu0 0
    %165 = vmatpush1.bf16.msra.mxu0 %v132
    %166 = vmatprep.subr.bf16.mxu0 0
    %167 = vmatpush1.bf16.msra.mxu0 %v131
    %168 = vmatprep.subr.bf16.mxu0 0
    %169 = vmatpush1.bf16.msra.mxu0 %v130
    %170 = vmatprep.subr.bf16.mxu0 0
    %171 = vmatpush2.bf16.msra.mxu0 0
    %172 = vmatprep.subr.bf16.mxu0 0
    %173 = vmatpush2.bf16.msra.mxu0 0
    %174 = vmatprep.subr.bf16.mxu0 0
    %175 = vmatpush2.bf16.msra.mxu0 0
    %176 = vmatprep.subr.bf16.mxu0 0
    %177 = vmatpush2.bf16.msra.mxu0 0
    %178 = vmatprep.subr.bf16.mxu0 0
    %179 = vmatpush2.bf16.msra.mxu0 0
    %180 = vmatprep.subr.bf16.mxu0 0
    %181 = vmatpush2.bf16.msra.mxu0 0
    %182 = vmatprep.subr.bf16.mxu0 0
    %183 = vmatpush2.bf16.msra.mxu0 %v139
    %184 = vmatprep.subr.bf16.mxu0 0
    %185 = vmatpush2.bf16.msra.mxu0 %v138
    %186 = vmatprep.mubr.bf16.mxu0 %v152
    %187 = vmatmul.mubr.bf16.gmra.mxu0 %v87
    %v188 = vpop.f32.mrf.mxu0
    %v189 = vadd.f32 0.0, %v188
    %v190 = vpop.f32.mrf.mxu0
    %v191 = vpop.f32.mrf.mxu0
    %v192 = vadd.f32 0.0, %v191
    %v193 = vpop.f32.mrf.mxu0
    %194 = vdwg.mxu0
    %v195 = vadd.f32 %v57, %v189
    %v196 = vadd.f32 %v58, %v192
    %197 = vst [vmem:[#allocation2] sm:$0xff] %v195
    %198 = vst [vmem:[#allocation2 + $0x8] sm:$0xff] %v196
    // Predicated region
    $region26: #{tpu_custom_call.1} parent=1 // pred_check
      %p199 = pneg %p44
    $region27: #{tpu_custom_call.1} parent=1 // pred_check_branch
      %201 = sbr.rel (%p199) target = $region29
    $region28: #{tpu_custom_call.1} parent=1 // pred_region
      %v202 = vld [vmem:[#allocation2] sm:$0xff]
      %v203 = vld [vmem:[#allocation2 + $0x8] sm:$0xff]
      %v204 = vmul.f32 %v202, 0.1
      %v205 = vmul.f32 %v203, 0.1
      %v206 = vmax.f32 %v202, %v204
      %v207 = vmax.f32 %v203, %v205
      %v208 = vpack.c.bf16 %v207, %v206
      %v210 = vunpack.c.l.b16 %v208
      %v211 = vunpack.c.h.b16 %v208
      %v212 = vpack.c.b16 %v210, %v210
      %v213 = vpack.c.b16 %v211, %v211
      %216 = vst [vmem:[#allocation8] sm:$0xf] %v212
      %217 = vst [vmem:[#allocation8 + $0x4] sm:$0xf] %v213
    $region29: #{tpu_custom_call.1} parent=1 // pred_fallthru
      _
    // Predicated region
    $region30: #{tpu_custom_call.1} parent=1 // pred_check
      _
    $region31: #{tpu_custom_call.1} parent=1 // pred_check_branch
      %219 = sbr.rel (0) target = $region33
    $region32: #{tpu_custom_call.1} parent=1 // pred_region
      %s221 = ssub.s32 128, 64
      %222 = vsyncadd [#allocation5], %s221
      %s223 = sshll.u32 [#allocation8], 4
      %s224 = int_to_ptr.vmem [resolvable:$true] %s223
      %229 = dma.vmem_to_hbm [thread:$0]  %s224, 64, %s3, [#allocation5], 64, 64, 4
    $region33: #{tpu_custom_call.1} parent=1 // pred_fallthru
      _
    // Predicated region
    $region34: #{tpu_custom_call.1} parent=1 // pred_check
      _
    $region35: #{tpu_custom_call.1} parent=1 // pred_check_branch
      %231 = sbr.rel (0) target = $region37
    $region36: #{tpu_custom_call.1} parent=1 // pred_region
      %232 = dma.done [#allocation5], 128
    $region37: #{tpu_custom_call.1} parent=1 // pred_fallthru
      _
    %233 = vsyncpa [#allocation4], 1
    %234 = vsyncpa [#allocation7], 1
    %235 = vsyncpa [#allocation5], 1

</llo_original>
